<compile_context>
chip_gen: v6e
topology: v6e:2x2x1
jax: 0.10.0
libtpu: 0.0.40
codegen_flags: <defaults>
</compile_context>

<pallas_src>
import functools

import jax
import jax.numpy as jnp
from jax import lax
from jax.experimental import pallas as pl
from jax.experimental.pallas import tpu as pltpu


# ------------------------------ fused generator kernel ------------------------------

def _fused_kernel(z_ref, w_in_ref, b_in_ref, w_all_ref, pp_ref, w_out_ref, b_out_ref,
                  o_ref, xs_ref, *halo_refs, kernel_size, dilations, tl):
    """One (batch element, L-tile) per grid step; all layers applied in VMEM.

    z_ref    : (1, TL, Dlat)  bf16 latent tile
    w_in_ref : (C, Dlat)      bf16
    b_in_ref : (C, 1)         f32
    w_all_ref: (B, C, K*C)    bf16 stacked conv weights, cols [kk*C:(kk+1)*C] = w[:, :, kk]
    pp_ref   : (B, C, 3)      f32 packed per-channel [conv bias, bn scale, bn shift]
    w_out_ref: (Dout, C)      bf16
    b_out_ref: (Dout, 1)      f32
    o_ref    : (1, Dout, TL)  f32
    xs_ref   : (K*C, TL)      bf16 VMEM scratch (stacked shifted conv operand, reused per layer)
    halo_refs: per layer (C, pad_b) bf16 VMEM scratch carrying the causal left context
               across L-tiles (persistent across grid steps of the 'arbitrary' axis).
    """
    K = kernel_size
    j = pl.program_id(1)

    # Start of a new batch element / sequence: clear all causal-halo carries.
    @pl.when(j == 0)
    def _():
        for h_ref in halo_refs:
            h_ref[...] = jnp.zeros_like(h_ref)

    # ---- input Linear in (C, L) layout: x^T = W_in @ z^T  -> (C, TL), f32 ----
    x = lax.dot_general(w_in_ref[...], z_ref[0],
                        dimension_numbers=(((1,), (1,)), ((), ())),
                        preferred_element_type=jnp.float32)
    x = x + b_in_ref[...]                              # (C, 1) bias, lane-broadcast

    C = x.shape[0]

    # ---- TCN blocks (unrolled); activations stay resident, f32 carry ----
    for b, d in enumerate(dilations):
        pad = (K - 1) * d
        hv = halo_refs[b][...]                          # (C, pad) previous-tile context
        xb = x.astype(xs_ref.dtype)                     # (C, TL) bf16 matmul operand

        # Stacked-shift operand: tap kk reads cols [kk*d, kk*d + TL) of [halo | x].
        for kk in range(K):
            s = kk * d
            h = min(max(pad - s, 0), tl)                # leading cols sourced from halo
            r = kk * C
            if h > 0:
                xs_ref[r:r + C, 0:h] = hv[:, s:s + h]
            if h < tl:
                xs_ref[r:r + C, h:tl] = xb[:, 0:tl - h]

        # Carry the causal halo for the next tile: last `pad` cols of [halo | x].
        if pad <= tl:
            halo_refs[b][...] = xb[:, tl - pad:tl]
        else:  # deep dilation: halo spans more than one tile
            halo_refs[b][:, 0:pad - tl] = hv[:, tl:pad]
            halo_refs[b][:, pad - tl:pad] = xb

        # One fused MXU matmul for all K dilated taps (f32 accumulation).
        acc = jnp.dot(w_all_ref[b], xs_ref[...], preferred_element_type=jnp.float32)

        pp = pp_ref[b]                                  # (C, 3) f32
        bias, scale, shift = pp[:, 0:1], pp[:, 1:2], pp[:, 2:3]
        out = jnp.maximum(acc + bias, 0.0)              # conv bias + ReLU (Dropout=identity, eval)
        out = out * scale + shift                       # BatchNorm1d (eval) folded to scale/shift
        x = jnp.maximum(out + x, 0.0)                   # identity residual + ReLU (f32 carry)

    # ---- output Linear in (C, L) layout: y^T = W_out @ x^T -> (Dout, TL) ----
    y = jnp.dot(w_out_ref[...], x.astype(w_out_ref.dtype),
                preferred_element_type=jnp.float32)
    o_ref[0] = (y + b_out_ref[...]).astype(o_ref.dtype)


# ------------------------------------ wrapper ------------------------------------

def _round_up(x, m):
    return (x + m - 1) // m * m


def _pick_tile(lp, cap):
    """Largest lane-dense tile (multiple of 128, <= cap) dividing the padded length."""
    nlanes = lp // 128
    cap_tiles = max(1, cap // 128)
    best = 1
    for t in range(1, min(nlanes, cap_tiles) + 1):
        if nlanes % t == 0:
            best = t
    return best * 128


def tcn_generator(z, params, *, kernel_size=3, eps=1e-5,
                  compute_dtype=jnp.bfloat16, tile_cap=512):
    """z: (N, L, latent_dim) -> (N, L, output_dim). Fully fused eval-mode forward.

    tile_cap: sequence-tile cap (multiple of 128).  512 is safe on all generations
    (v7x's 64 MiB VMEM included); on v6e/v5e it can be raised to 1024-2048 for long L.
    """
    N, L, Dlat = z.shape
    C = params["w_in"].shape[0]
    Dout = params["w_out"].shape[0]
    blocks = params["blocks"]
    B = len(blocks)
    K = kernel_size
    assert K >= 2, "kernel_size >= 2 expected (module default is 3)"
    assert B >= 1
    dilations = tuple(2 ** i for i in range(B))

    Lp = _round_up(L, 128)
    TL = _pick_tile(Lp, tile_cap)
    nT = Lp // TL

    # bf16 data path for the matmul operands; causal conv => zero-padding the tail of L
    # never affects the valid outputs, which are sliced back out below.
    zb = z.astype(compute_dtype)
    if Lp != L:
        zb = jnp.pad(zb, ((0, 0), (0, Lp - L), (0, 0)))

    w_in = params["w_in"].astype(compute_dtype)                         # (C, Dlat)
    b_in = params["b_in"].reshape(C, 1).astype(jnp.float32)
    w_out = params["w_out"].astype(compute_dtype)                       # (Dout, C)
    b_out = params["b_out"].reshape(Dout, 1).astype(jnp.float32)

    # Stack each block's K taps: (B, C, K*C), cols [kk*C:(kk+1)*C] = w[:, :, kk].
    w_all = jnp.stack(
        [jnp.transpose(blk["w"], (0, 2, 1)).reshape(C, K * C) for blk in blocks],
        axis=0).astype(compute_dtype)

    # Fold BatchNorm (eval, running stats) into per-channel scale/shift; pack with bias.
    pps = []
    for blk in blocks:
        scale = blk["gamma"] * lax.rsqrt(blk["rv"] + eps)
        shift = blk["beta"] - blk["rm"] * scale
        pps.append(jnp.stack([blk["b"], scale, shift], axis=1))
    pp = jnp.stack(pps, axis=0).astype(jnp.float32)                     # (B, C, 3)

    kernel = functools.partial(_fused_kernel, kernel_size=K, dilations=dilations, tl=TL)
    out = pl.pallas_call(
        kernel,
        out_shape=jax.ShapeDtypeStruct((N, Dout, Lp), jnp.float32),
        grid_spec=pltpu.PrefetchScalarGridSpec(
            num_scalar_prefetch=0,
            grid=(N, nT),
            in_specs=[
                pl.BlockSpec((1, TL, Dlat), lambda n, j: (n, j, 0)),    # latent tile
                pl.BlockSpec((C, Dlat), lambda n, j: (0, 0)),           # W_in
                pl.BlockSpec((C, 1), lambda n, j: (0, 0)),              # b_in
                pl.BlockSpec((B, C, K * C), lambda n, j: (0, 0, 0)),    # stacked conv weights
                pl.BlockSpec((B, C, 3), lambda n, j: (0, 0, 0)),        # packed per-channel params
                pl.BlockSpec((Dout, C), lambda n, j: (0, 0)),           # W_out
                pl.BlockSpec((Dout, 1), lambda n, j: (0, 0)),           # b_out
            ],
            out_specs=pl.BlockSpec((1, Dout, TL), lambda n, j: (n, 0, j)),
            scratch_shapes=(
                [pltpu.VMEM((K * C, TL), compute_dtype)]                             # stacked operand
                + [pltpu.VMEM((C, (K - 1) * d), compute_dtype) for d in dilations]), # per-layer halos
        ),
        compiler_params=pltpu.CompilerParams(
            # N is megacore-parallel; the L-tile axis carries the causal halo -> arbitrary.
            dimension_semantics=("parallel", "arbitrary"),
            vmem_limit_bytes=32 * 1024 * 1024),
    )(zb, w_in, b_in, w_all, pp, w_out, b_out)

    out = out[:, :, :L]
    return jnp.transpose(out, (0, 2, 1))   # only the tiny (N, Dout, L) result is transposed


# ---------------------------------- JAX reference ----------------------------------

def tcn_generator_ref(z, params, *, kernel_size=3, eps=1e-5, compute_dtype=jnp.bfloat16):
    """Plain-JAX reference mirroring the PyTorch eval forward and the kernel's bf16/f32 split."""
    N, L, Dlat = z.shape
    K = kernel_size
    zb = z.astype(compute_dtype)
    w_in = params["w_in"].astype(compute_dtype)
    x = jnp.einsum("nld,cd->ncl", zb, w_in, preferred_element_type=jnp.float32)
    x = x + params["b_in"][None, :, None]                        # (N, C, L) f32
    for i, blk in enumerate(params["blocks"]):
        d = 2 ** i
        pad = (K - 1) * d
        xb = x.astype(compute_dtype)
        xp = jnp.pad(xb, ((0, 0), (0, 0), (pad, 0)))             # causal left pad
        w = blk["w"].astype(compute_dtype)
        acc = jnp.zeros_like(x)
        for kk in range(K):
            acc = acc + jnp.einsum("oi,nil->nol", w[:, :, kk], xp[:, :, kk * d:kk * d + L],
                                   preferred_element_type=jnp.float32)
        scale = blk["gamma"] * lax.rsqrt(blk["rv"] + eps)
        shift = blk["beta"] - blk["rm"] * scale
        out = jnp.maximum(acc + blk["b"][None, :, None], 0.0)    # relu; dropout = identity (eval)
        out = out * scale[None, :, None] + shift[None, :, None]  # BatchNorm1d (eval)
        x = jnp.maximum(out + x, 0.0)                            # identity residual + relu
    w_out = params["w_out"].astype(compute_dtype)
    y = jnp.einsum("ncl,oc->nlo", x.astype(compute_dtype), w_out,
                   preferred_element_type=jnp.float32)
    return y + params["b_out"][None, None, :]


# --------------------------------------- demo ---------------------------------------

if __name__ == "__main__":
    N, L = 2, 200
    latent_dim, num_channels, output_dim = 8, 16, 4
    num_layers, K = 3, 3

    key = jax.random.PRNGKey(0)
    keys = jax.random.split(key, 5 + 6 * num_layers)
    ki = iter(keys)
    params = {
        "w_in":  0.3 * jax.random.normal(next(ki), (num_channels, latent_dim), jnp.float32),
        "b_in":  0.1 * jax.random.normal(next(ki), (num_channels,), jnp.float32),
        "w_out": 0.3 * jax.random.normal(next(ki), (output_dim, num_channels), jnp.float32),
        "b_out": 0.1 * jax.random.normal(next(ki), (output_dim,), jnp.float32),
        "blocks": [],
    }
    for _ in range(num_layers):
        params["blocks"].append({
            "w":     0.3 * jax.random.normal(next(ki), (num_channels, num_channels, K), jnp.float32),
            "b":     0.1 * jax.random.normal(next(ki), (num_channels,), jnp.float32),
            "gamma": 1.0 + 0.1 * jax.random.normal(next(ki), (num_channels,), jnp.float32),
            "beta":  0.1 * jax.random.normal(next(ki), (num_channels,), jnp.float32),
            "rm":    0.1 * jax.random.normal(next(ki), (num_channels,), jnp.float32),
            "rv":    0.5 + jax.random.uniform(next(ki), (num_channels,), jnp.float32),
        })
    z = jax.random.normal(next(ki), (N, L, latent_dim), jnp.float32)

    # tile_cap=128 forces multiple L-tiles at this small L, exercising the VMEM halo
    # carry across tiles and the L-padding/slicing path (L=200 -> Lp=256, two tiles).
    out = tcn_generator(z, params, kernel_size=K, tile_cap=128)
    out = jax.block_until_ready(out)

    ref = tcn_generator_ref(z, params, kernel_size=K)
    assert out.shape == (N, L, output_dim)
    err = float(jnp.max(jnp.abs(out - ref)))
    assert jnp.allclose(out, ref, atol=5e-3, rtol=5e-3), f"max err {err}"
    print("KERNEL_OK")
</pallas_src>

<mosaic_0001>
module attributes {stable_mosaic.version = 11 : i64} {
  func.func @_fused_kernel(%arg0: i32, %arg1: i32, %arg2: memref<1x128x8xbf16, #tpu.memory_space<vmem>>, %arg3: memref<16x8xbf16, #tpu.memory_space<vmem>>, %arg4: memref<16x1xf32, #tpu.memory_space<vmem>>, %arg5: memref<3x16x48xbf16, #tpu.memory_space<vmem>>, %arg6: memref<3x16x3xf32, #tpu.memory_space<vmem>>, %arg7: memref<4x16xbf16, #tpu.memory_space<vmem>>, %arg8: memref<4x1xf32, #tpu.memory_space<vmem>>, %arg9: memref<1x4x128xf32, #tpu.memory_space<vmem>>, %arg10: memref<48x128xbf16, #tpu.memory_space<vmem>>, %arg11: memref<16x2xbf16, #tpu.memory_space<vmem>>, %arg12: memref<16x4xbf16, #tpu.memory_space<vmem>>, %arg13: memref<16x8xbf16, #tpu.memory_space<vmem>>) attributes {dimension_semantics = [#tpu.dimension_semantics<parallel>, #tpu.dimension_semantics<arbitrary>], iteration_bounds = array<i64: 2, 2>, scalar_prefetch = 0 : i64, scratch_operands = 4 : i64, tpu.core_type = #tpu.core_type<tc>, window_params = [{transform_indices = @transform_0, window_bounds = array<i64: 1, 128, 8>}, {pipeline_mode = #tpu.pipeline_mode<synchronous>, transform_indices = @transform_1, window_bounds = array<i64: 16, 8>}, {pipeline_mode = #tpu.pipeline_mode<synchronous>, transform_indices = @transform_2, window_bounds = array<i64: 16, 1>}, {pipeline_mode = #tpu.pipeline_mode<synchronous>, transform_indices = @transform_3, window_bounds = array<i64: 3, 16, 48>}, {pipeline_mode = #tpu.pipeline_mode<synchronous>, transform_indices = @transform_4, window_bounds = array<i64: 3, 16, 3>}, {pipeline_mode = #tpu.pipeline_mode<synchronous>, transform_indices = @transform_5, window_bounds = array<i64: 4, 16>}, {pipeline_mode = #tpu.pipeline_mode<synchronous>, transform_indices = @transform_6, window_bounds = array<i64: 4, 1>}, {transform_indices = @transform_7, window_bounds = array<i64: 1, 4, 128>}]} {
    %c0_i32 = arith.constant 0 : i32
    %0 = arith.cmpi eq, %arg1, %c0_i32 : i32
    %1 = arith.extui %0 : i1 to i32
    %c0_i32_0 = arith.constant 0 : i32
    %2 = arith.cmpi ne, %1, %c0_i32_0 : i32
    scf.if %2 {
      %cst_84 = arith.constant 0.000000e+00 : bf16
      %115 = vector.broadcast %cst_84 : bf16 to vector<16x2xbf16>
      %c0_85 = arith.constant 0 : index
      %c0_86 = arith.constant 0 : index
      %116 = vector.load %arg11[%c0_85, %c0_86] : memref<16x2xbf16, #tpu.memory_space<vmem>>, vector<16x2xbf16>
      tpu.vector_store %arg11[%c0_85, %c0_86], %115 {strides = array<i32>} : memref<16x2xbf16, #tpu.memory_space<vmem>>, vector<16x2xbf16>,
      %cst_87 = arith.constant 0.000000e+00 : bf16
      %117 = vector.broadcast %cst_87 : bf16 to vector<16x4xbf16>
      %c0_88 = arith.constant 0 : index
      %c0_89 = arith.constant 0 : index
      %118 = vector.load %arg12[%c0_88, %c0_89] : memref<16x4xbf16, #tpu.memory_space<vmem>>, vector<16x4xbf16>
      tpu.vector_store %arg12[%c0_88, %c0_89], %117 {strides = array<i32>} : memref<16x4xbf16, #tpu.memory_space<vmem>>, vector<16x4xbf16>,
      %cst_90 = arith.constant 0.000000e+00 : bf16
      %119 = vector.broadcast %cst_90 : bf16 to vector<16x8xbf16>
      %c0_91 = arith.constant 0 : index
      %c0_92 = arith.constant 0 : index
      %120 = vector.load %arg13[%c0_91, %c0_92] : memref<16x8xbf16, #tpu.memory_space<vmem>>, vector<16x8xbf16>
      tpu.vector_store %arg13[%c0_91, %c0_92], %119 {strides = array<i32>} : memref<16x8xbf16, #tpu.memory_space<vmem>>, vector<16x8xbf16>,
    } else {
    }
    %c0 = arith.constant 0 : index
    %c0_1 = arith.constant 0 : index
    %3 = vector.load %arg3[%c0, %c0_1] : memref<16x8xbf16, #tpu.memory_space<vmem>>, vector<16x8xbf16>
    %c0_2 = arith.constant 0 : index
    %c0_3 = arith.constant 0 : index
    %c0_4 = arith.constant 0 : index
    %4 = vector.load %arg2[%c0_2, %c0_3, %c0_4] : memref<1x128x8xbf16, #tpu.memory_space<vmem>>, vector<1x128x8xbf16>
    %5 = vector.shape_cast %4 : vector<1x128x8xbf16> to vector<128x8xbf16>
    %cst = arith.constant dense<0.000000e+00> : vector<16x128xf32>
    %6 = tpu.matmul %3, %5, %cst {dimension_numbers = #tpu.dot_dimension_numbers<[1], [1], [0], [0], [0, 0, 1, 0], [], []>} : vector<16x8xbf16>, vector<128x8xbf16>, vector<16x128xf32> -> vector<16x128xf32>
    %c0_5 = arith.constant 0 : index
    %c0_6 = arith.constant 0 : index
    %7 = vector.load %arg4[%c0_5, %c0_6] : memref<16x1xf32, #tpu.memory_space<vmem>>, vector<16x1xf32>
    %8 = vector.broadcast %7 : vector<16x1xf32> to vector<16x128xf32>
    %9 = arith.addf %6, %8 : vector<16x128xf32>
    %c0_7 = arith.constant 0 : index
    %c0_8 = arith.constant 0 : index
    %10 = vector.load %arg11[%c0_7, %c0_8] : memref<16x2xbf16, #tpu.memory_space<vmem>>, vector<16x2xbf16>
    %11 = arith.truncf %9 : vector<16x128xf32> to vector<16x128xbf16>
    %c0_9 = arith.constant 0 : index
    %c0_10 = arith.constant 0 : index
    %12 = vector.load %arg10[%c0_9, %c0_10] : memref<48x128xbf16, #tpu.memory_space<vmem>>, vector<16x2xbf16>
    tpu.vector_store %arg10[%c0_9, %c0_10], %10 {strides = array<i32>} : memref<48x128xbf16, #tpu.memory_space<vmem>>, vector<16x2xbf16>,
    %13 = vector.extract_strided_slice %11 {offsets = [0, 0], sizes = [16, 126], strides = [1, 1]} : vector<16x128xbf16> to vector<16x126xbf16>
    %c0_11 = arith.constant 0 : index
    %c2 = arith.constant 2 : index
    %14 = vector.load %arg10[%c0_11, %c2] : memref<48x128xbf16, #tpu.memory_space<vmem>>, vector<16x126xbf16>
    tpu.vector_store %arg10[%c0_11, %c2], %13 {strides = array<i32>} : memref<48x128xbf16, #tpu.memory_space<vmem>>, vector<16x126xbf16>,
    %15 = vector.extract_strided_slice %10 {offsets = [0, 1], sizes = [16, 1], strides = [1, 1]} : vector<16x2xbf16> to vector<16x1xbf16>
    %c16 = arith.constant 16 : index
    %c0_12 = arith.constant 0 : index
    %16 = vector.load %arg10[%c16, %c0_12] : memref<48x128xbf16, #tpu.memory_space<vmem>>, vector<16x1xbf16>
    tpu.vector_store %arg10[%c16, %c0_12], %15 {strides = array<i32>} : memref<48x128xbf16, #tpu.memory_space<vmem>>, vector<16x1xbf16>,
    %17 = vector.extract_strided_slice %11 {offsets = [0, 0], sizes = [16, 127], strides = [1, 1]} : vector<16x128xbf16> to vector<16x127xbf16>
    %c16_13 = arith.constant 16 : index
    %c1 = arith.constant 1 : index
    %18 = vector.load %arg10[%c16_13, %c1] : memref<48x128xbf16, #tpu.memory_space<vmem>>, vector<16x127xbf16>
    tpu.vector_store %arg10[%c16_13, %c1], %17 {strides = array<i32>} : memref<48x128xbf16, #tpu.memory_space<vmem>>, vector<16x127xbf16>,
    %c32 = arith.constant 32 : index
    %c0_14 = arith.constant 0 : index
    %19 = vector.load %arg10[%c32, %c0_14] : memref<48x128xbf16, #tpu.memory_space<vmem>>, vector<16x128xbf16>
    tpu.vector_store %arg10[%c32, %c0_14], %11 {strides = array<i32>} : memref<48x128xbf16, #tpu.memory_space<vmem>>, vector<16x128xbf16>,
    %20 = vector.extract_strided_slice %11 {offsets = [0, 126], sizes = [16, 2], strides = [1, 1]} : vector<16x128xbf16> to vector<16x2xbf16>
    %c0_15 = arith.constant 0 : index
    %c0_16 = arith.constant 0 : index
    %21 = vector.load %arg11[%c0_15, %c0_16] : memref<16x2xbf16, #tpu.memory_space<vmem>>, vector<16x2xbf16>
    tpu.vector_store %arg11[%c0_15, %c0_16], %20 {strides = array<i32>} : memref<16x2xbf16, #tpu.memory_space<vmem>>, vector<16x2xbf16>,
    %c0_17 = arith.constant 0 : index
    %c0_18 = arith.constant 0 : index
    %c0_19 = arith.constant 0 : index
    %22 = vector.load %arg5[%c0_17, %c0_18, %c0_19] : memref<3x16x48xbf16, #tpu.memory_space<vmem>>, vector<1x16x48xbf16>
    %23 = vector.shape_cast %22 : vector<1x16x48xbf16> to vector<16x48xbf16>
    %c0_20 = arith.constant 0 : index
    %c0_21 = arith.constant 0 : index
    %24 = vector.load %arg10[%c0_20, %c0_21] : memref<48x128xbf16, #tpu.memory_space<vmem>>, vector<48x128xbf16>
    %cst_22 = arith.constant dense<0.000000e+00> : vector<16x128xf32>
    %25 = tpu.matmul %23, %24, %cst_22 {dimension_numbers = #tpu.dot_dimension_numbers<[1], [0], [0], [1], [0, 0, 1, 1], [], []>} : vector<16x48xbf16>, vector<48x128xbf16>, vector<16x128xf32> -> vector<16x128xf32>
    %c0_23 = arith.constant 0 : index
    %c0_24 = arith.constant 0 : index
    %c0_25 = arith.constant 0 : index
    %26 = vector.load %arg6[%c0_23, %c0_24, %c0_25] : memref<3x16x3xf32, #tpu.memory_space<vmem>>, vector<1x16x3xf32>
    %27 = vector.shape_cast %26 : vector<1x16x3xf32> to vector<16x3xf32>
    %28 = vector.extract_strided_slice %27 {offsets = [0, 0], sizes = [16, 1], strides = [1, 1]} : vector<16x3xf32> to vector<16x1xf32>
    %29 = vector.extract_strided_slice %27 {offsets = [0, 1], sizes = [16, 1], strides = [1, 1]} : vector<16x3xf32> to vector<16x1xf32>
    %30 = vector.extract_strided_slice %27 {offsets = [0, 2], sizes = [16, 1], strides = [1, 1]} : vector<16x3xf32> to vector<16x1xf32>
    %31 = vector.broadcast %28 : vector<16x1xf32> to vector<16x128xf32>
    %32 = arith.addf %25, %31 : vector<16x128xf32>
    %cst_26 = arith.constant 0.000000e+00 : f32
    %33 = vector.broadcast %cst_26 : f32 to vector<16x128xf32>
    %34 = arith.maximumf %32, %33 : vector<16x128xf32>
    %35 = vector.broadcast %29 : vector<16x1xf32> to vector<16x128xf32>
    %36 = arith.mulf %34, %35 : vector<16x128xf32>
    %37 = vector.broadcast %30 : vector<16x1xf32> to vector<16x128xf32>
    %38 = arith.addf %36, %37 : vector<16x128xf32>
    %39 = arith.addf %38, %9 : vector<16x128xf32>
    %cst_27 = arith.constant 0.000000e+00 : f32
    %40 = vector.broadcast %cst_27 : f32 to vector<16x128xf32>
    %41 = arith.maximumf %39, %40 : vector<16x128xf32>
    %c0_28 = arith.constant 0 : index
    %c0_29 = arith.constant 0 : index
    %42 = vector.load %arg12[%c0_28, %c0_29] : memref<16x4xbf16, #tpu.memory_space<vmem>>, vector<16x4xbf16>
    %43 = arith.truncf %41 : vector<16x128xf32> to vector<16x128xbf16>
    %c0_30 = arith.constant 0 : index
    %c0_31 = arith.constant 0 : index
    %44 = vector.load %arg10[%c0_30, %c0_31] : memref<48x128xbf16, #tpu.memory_space<vmem>>, vector<16x4xbf16>
    tpu.vector_store %arg10[%c0_30, %c0_31], %42 {strides = array<i32>} : memref<48x128xbf16, #tpu.memory_space<vmem>>, vector<16x4xbf16>,
    %45 = vector.extract_strided_slice %43 {offsets = [0, 0], sizes = [16, 124], strides = [1, 1]} : vector<16x128xbf16> to vector<16x124xbf16>
    %c0_32 = arith.constant 0 : index
    %c4 = arith.constant 4 : index
    %46 = vector.load %arg10[%c0_32, %c4] : memref<48x128xbf16, #tpu.memory_space<vmem>>, vector<16x124xbf16>
    tpu.vector_store %arg10[%c0_32, %c4], %45 {strides = array<i32>} : memref<48x128xbf16, #tpu.memory_space<vmem>>, vector<16x124xbf16>,
    %47 = vector.extract_strided_slice %42 {offsets = [0, 2], sizes = [16, 2], strides = [1, 1]} : vector<16x4xbf16> to vector<16x2xbf16>
    %c16_33 = arith.constant 16 : index
    %c0_34 = arith.constant 0 : index
    %48 = vector.load %arg10[%c16_33, %c0_34] : memref<48x128xbf16, #tpu.memory_space<vmem>>, vector<16x2xbf16>
    tpu.vector_store %arg10[%c16_33, %c0_34], %47 {strides = array<i32>} : memref<48x128xbf16, #tpu.memory_space<vmem>>, vector<16x2xbf16>,
    %49 = vector.extract_strided_slice %43 {offsets = [0, 0], sizes = [16, 126], strides = [1, 1]} : vector<16x128xbf16> to vector<16x126xbf16>
    %c16_35 = arith.constant 16 : index
    %c2_36 = arith.constant 2 : index
    %50 = vector.load %arg10[%c16_35, %c2_36] : memref<48x128xbf16, #tpu.memory_space<vmem>>, vector<16x126xbf16>
    tpu.vector_store %arg10[%c16_35, %c2_36], %49 {strides = array<i32>} : memref<48x128xbf16, #tpu.memory_space<vmem>>, vector<16x126xbf16>,
    %c32_37 = arith.constant 32 : index
    %c0_38 = arith.constant 0 : index
    %51 = vector.load %arg10[%c32_37, %c0_38] : memref<48x128xbf16, #tpu.memory_space<vmem>>, vector<16x128xbf16>
    tpu.vector_store %arg10[%c32_37, %c0_38], %43 {strides = array<i32>} : memref<48x128xbf16, #tpu.memory_space<vmem>>, vector<16x128xbf16>,
    %52 = vector.extract_strided_slice %43 {offsets = [0, 124], sizes = [16, 4], strides = [1, 1]} : vector<16x128xbf16> to vector<16x4xbf16>
    %c0_39 = arith.constant 0 : index
    %c0_40 = arith.constant 0 : index
    %53 = vector.load %arg12[%c0_39, %c0_40] : memref<16x4xbf16, #tpu.memory_space<vmem>>, vector<16x4xbf16>
    tpu.vector_store %arg12[%c0_39, %c0_40], %52 {strides = array<i32>} : memref<16x4xbf16, #tpu.memory_space<vmem>>, vector<16x4xbf16>,
    %c1_41 = arith.constant 1 : index
    %c0_42 = arith.constant 0 : index
    %c0_43 = arith.constant 0 : index
    %54 = vector.load %arg5[%c1_41, %c0_42, %c0_43] : memref<3x16x48xbf16, #tpu.memory_space<vmem>>, vector<1x16x48xbf16>
    %55 = vector.shape_cast %54 : vector<1x16x48xbf16> to vector<16x48xbf16>
    %c0_44 = arith.constant 0 : index
    %c0_45 = arith.constant 0 : index
    %56 = vector.load %arg10[%c0_44, %c0_45] : memref<48x128xbf16, #tpu.memory_space<vmem>>, vector<48x128xbf16>
    %cst_46 = arith.constant dense<0.000000e+00> : vector<16x128xf32>
    %57 = tpu.matmul %55, %56, %cst_46 {dimension_numbers = #tpu.dot_dimension_numbers<[1], [0], [0], [1], [0, 0, 1, 1], [], []>} : vector<16x48xbf16>, vector<48x128xbf16>, vector<16x128xf32> -> vector<16x128xf32>
    %c1_47 = arith.constant 1 : index
    %c0_48 = arith.constant 0 : index
    %c0_49 = arith.constant 0 : index
    %58 = vector.load %arg6[%c1_47, %c0_48, %c0_49] : memref<3x16x3xf32, #tpu.memory_space<vmem>>, vector<1x16x3xf32>
    %59 = vector.shape_cast %58 : vector<1x16x3xf32> to vector<16x3xf32>
    %60 = vector.extract_strided_slice %59 {offsets = [0, 0], sizes = [16, 1], strides = [1, 1]} : vector<16x3xf32> to vector<16x1xf32>
    %61 = vector.extract_strided_slice %59 {offsets = [0, 1], sizes = [16, 1], strides = [1, 1]} : vector<16x3xf32> to vector<16x1xf32>
    %62 = vector.extract_strided_slice %59 {offsets = [0, 2], sizes = [16, 1], strides = [1, 1]} : vector<16x3xf32> to vector<16x1xf32>
    %63 = vector.broadcast %60 : vector<16x1xf32> to vector<16x128xf32>
    %64 = arith.addf %57, %63 : vector<16x128xf32>
    %cst_50 = arith.constant 0.000000e+00 : f32
    %65 = vector.broadcast %cst_50 : f32 to vector<16x128xf32>
    %66 = arith.maximumf %64, %65 : vector<16x128xf32>
    %67 = vector.broadcast %61 : vector<16x1xf32> to vector<16x128xf32>
    %68 = arith.mulf %66, %67 : vector<16x128xf32>
    %69 = vector.broadcast %62 : vector<16x1xf32> to vector<16x128xf32>
    %70 = arith.addf %68, %69 : vector<16x128xf32>
    %71 = arith.addf %70, %41 : vector<16x128xf32>
    %cst_51 = arith.constant 0.000000e+00 : f32
    %72 = vector.broadcast %cst_51 : f32 to vector<16x128xf32>
    %73 = arith.maximumf %71, %72 : vector<16x128xf32>
    %c0_52 = arith.constant 0 : index
    %c0_53 = arith.constant 0 : index
    %74 = vector.load %arg13[%c0_52, %c0_53] : memref<16x8xbf16, #tpu.memory_space<vmem>>, vector<16x8xbf16>
    %75 = arith.truncf %73 : vector<16x128xf32> to vector<16x128xbf16>
    %c0_54 = arith.constant 0 : index
    %c0_55 = arith.constant 0 : index
    %76 = vector.load %arg10[%c0_54, %c0_55] : memref<48x128xbf16, #tpu.memory_space<vmem>>, vector<16x8xbf16>
    tpu.vector_store %arg10[%c0_54, %c0_55], %74 {strides = array<i32>} : memref<48x128xbf16, #tpu.memory_space<vmem>>, vector<16x8xbf16>,
    %77 = vector.extract_strided_slice %75 {offsets = [0, 0], sizes = [16, 120], strides = [1, 1]} : vector<16x128xbf16> to vector<16x120xbf16>
    %c0_56 = arith.constant 0 : index
    %c8 = arith.constant 8 : index
    %78 = vector.load %arg10[%c0_56, %c8] : memref<48x128xbf16, #tpu.memory_space<vmem>>, vector<16x120xbf16>
    tpu.vector_store %arg10[%c0_56, %c8], %77 {strides = array<i32>} : memref<48x128xbf16, #tpu.memory_space<vmem>>, vector<16x120xbf16>,
    %79 = vector.extract_strided_slice %74 {offsets = [0, 4], sizes = [16, 4], strides = [1, 1]} : vector<16x8xbf16> to vector<16x4xbf16>
    %c16_57 = arith.constant 16 : index
    %c0_58 = arith.constant 0 : index
    %80 = vector.load %arg10[%c16_57, %c0_58] : memref<48x128xbf16, #tpu.memory_space<vmem>>, vector<16x4xbf16>
    tpu.vector_store %arg10[%c16_57, %c0_58], %79 {strides = array<i32>} : memref<48x128xbf16, #tpu.memory_space<vmem>>, vector<16x4xbf16>,
    %81 = vector.extract_strided_slice %75 {offsets = [0, 0], sizes = [16, 124], strides = [1, 1]} : vector<16x128xbf16> to vector<16x124xbf16>
    %c16_59 = arith.constant 16 : index
    %c4_60 = arith.constant 4 : index
    %82 = vector.load %arg10[%c16_59, %c4_60] : memref<48x128xbf16, #tpu.memory_space<vmem>>, vector<16x124xbf16>
    tpu.vector_store %arg10[%c16_59, %c4_60], %81 {strides = array<i32>} : memref<48x128xbf16, #tpu.memory_space<vmem>>, vector<16x124xbf16>,
    %c32_61 = arith.constant 32 : index
    %c0_62 = arith.constant 0 : index
    %83 = vector.load %arg10[%c32_61, %c0_62] : memref<48x128xbf16, #tpu.memory_space<vmem>>, vector<16x128xbf16>
    tpu.vector_store %arg10[%c32_61, %c0_62], %75 {strides = array<i32>} : memref<48x128xbf16, #tpu.memory_space<vmem>>, vector<16x128xbf16>,
    %84 = vector.extract_strided_slice %75 {offsets = [0, 120], sizes = [16, 8], strides = [1, 1]} : vector<16x128xbf16> to vector<16x8xbf16>
    %c0_63 = arith.constant 0 : index
    %c0_64 = arith.constant 0 : index
    %85 = vector.load %arg13[%c0_63, %c0_64] : memref<16x8xbf16, #tpu.memory_space<vmem>>, vector<16x8xbf16>
    tpu.vector_store %arg13[%c0_63, %c0_64], %84 {strides = array<i32>} : memref<16x8xbf16, #tpu.memory_space<vmem>>, vector<16x8xbf16>,
    %c2_65 = arith.constant 2 : index
    %c0_66 = arith.constant 0 : index
    %c0_67 = arith.constant 0 : index
    %86 = vector.load %arg5[%c2_65, %c0_66, %c0_67] : memref<3x16x48xbf16, #tpu.memory_space<vmem>>, vector<1x16x48xbf16>
    %87 = vector.shape_cast %86 : vector<1x16x48xbf16> to vector<16x48xbf16>
    %c0_68 = arith.constant 0 : index
    %c0_69 = arith.constant 0 : index
    %88 = vector.load %arg10[%c0_68, %c0_69] : memref<48x128xbf16, #tpu.memory_space<vmem>>, vector<48x128xbf16>
    %cst_70 = arith.constant dense<0.000000e+00> : vector<16x128xf32>
    %89 = tpu.matmul %87, %88, %cst_70 {dimension_numbers = #tpu.dot_dimension_numbers<[1], [0], [0], [1], [0, 0, 1, 1], [], []>} : vector<16x48xbf16>, vector<48x128xbf16>, vector<16x128xf32> -> vector<16x128xf32>
    %c2_71 = arith.constant 2 : index
    %c0_72 = arith.constant 0 : index
    %c0_73 = arith.constant 0 : index
    %90 = vector.load %arg6[%c2_71, %c0_72, %c0_73] : memref<3x16x3xf32, #tpu.memory_space<vmem>>, vector<1x16x3xf32>
    %91 = vector.shape_cast %90 : vector<1x16x3xf32> to vector<16x3xf32>
    %92 = vector.extract_strided_slice %91 {offsets = [0, 0], sizes = [16, 1], strides = [1, 1]} : vector<16x3xf32> to vector<16x1xf32>
    %93 = vector.extract_strided_slice %91 {offsets = [0, 1], sizes = [16, 1], strides = [1, 1]} : vector<16x3xf32> to vector<16x1xf32>
    %94 = vector.extract_strided_slice %91 {offsets = [0, 2], sizes = [16, 1], strides = [1, 1]} : vector<16x3xf32> to vector<16x1xf32>
    %95 = vector.broadcast %92 : vector<16x1xf32> to vector<16x128xf32>
    %96 = arith.addf %89, %95 : vector<16x128xf32>
    %cst_74 = arith.constant 0.000000e+00 : f32
    %97 = vector.broadcast %cst_74 : f32 to vector<16x128xf32>
    %98 = arith.maximumf %96, %97 : vector<16x128xf32>
    %99 = vector.broadcast %93 : vector<16x1xf32> to vector<16x128xf32>
    %100 = arith.mulf %98, %99 : vector<16x128xf32>
    %101 = vector.broadcast %94 : vector<16x1xf32> to vector<16x128xf32>
    %102 = arith.addf %100, %101 : vector<16x128xf32>
    %103 = arith.addf %102, %73 : vector<16x128xf32>
    %cst_75 = arith.constant 0.000000e+00 : f32
    %104 = vector.broadcast %cst_75 : f32 to vector<16x128xf32>
    %105 = arith.maximumf %103, %104 : vector<16x128xf32>
    %c0_76 = arith.constant 0 : index
    %c0_77 = arith.constant 0 : index
    %106 = vector.load %arg7[%c0_76, %c0_77] : memref<4x16xbf16, #tpu.memory_space<vmem>>, vector<4x16xbf16>
    %107 = arith.truncf %105 : vector<16x128xf32> to vector<16x128xbf16>
    %cst_78 = arith.constant dense<0.000000e+00> : vector<4x128xf32>
    %108 = tpu.matmul %106, %107, %cst_78 {dimension_numbers = #tpu.dot_dimension_numbers<[1], [0], [0], [1], [0, 0, 1, 1], [], []>} : vector<4x16xbf16>, vector<16x128xbf16>, vector<4x128xf32> -> vector<4x128xf32>
    %c0_79 = arith.constant 0 : index
    %c0_80 = arith.constant 0 : index
    %109 = vector.load %arg8[%c0_79, %c0_80] : memref<4x1xf32, #tpu.memory_space<vmem>>, vector<4x1xf32>
    %110 = vector.broadcast %109 : vector<4x1xf32> to vector<4x128xf32>
    %111 = arith.addf %108, %110 : vector<4x128xf32>
    %c0_81 = arith.constant 0 : index
    %c0_82 = arith.constant 0 : index
    %c0_83 = arith.constant 0 : index
    %112 = vector.load %arg9[%c0_81, %c0_82, %c0_83] : memref<1x4x128xf32, #tpu.memory_space<vmem>>, vector<1x4x128xf32>
    %113 = vector.shape_cast %112 : vector<1x4x128xf32> to vector<4x128xf32>
    %114 = vector.shape_cast %111 : vector<4x128xf32> to vector<1x4x128xf32>
    tpu.vector_store %arg9[%c0_81, %c0_82, %c0_83], %114 {strides = array<i32>} : memref<1x4x128xf32, #tpu.memory_space<vmem>>, vector<1x4x128xf32>,
    return
  }
  func.func @transform_0(%arg0: i32, %arg1: i32) -> (i32, i32, i32) {
    %c0_i32 = arith.constant 0 : i32
    %c0_i32_0 = arith.constant 0 : i32
    return %arg0, %arg1, %c0_i32 : i32, i32, i32
  }
  func.func @transform_1(%arg0: i32, %arg1: i32) -> (i32, i32) {
    %c0_i32 = arith.constant 0 : i32
    %c0_i32_0 = arith.constant 0 : i32
    %c0_i32_1 = arith.constant 0 : i32
    return %c0_i32, %c0_i32_0 : i32, i32
  }
  func.func @transform_2(%arg0: i32, %arg1: i32) -> (i32, i32) {
    %c0_i32 = arith.constant 0 : i32
    %c0_i32_0 = arith.constant 0 : i32
    %c0_i32_1 = arith.constant 0 : i32
    return %c0_i32, %c0_i32_0 : i32, i32
  }
  func.func @transform_3(%arg0: i32, %arg1: i32) -> (i32, i32, i32) {
    %c0_i32 = arith.constant 0 : i32
    %c0_i32_0 = arith.constant 0 : i32
    %c0_i32_1 = arith.constant 0 : i32
    %c0_i32_2 = arith.constant 0 : i32
    return %c0_i32, %c0_i32_0, %c0_i32_1 : i32, i32, i32
  }
  func.func @transform_4(%arg0: i32, %arg1: i32) -> (i32, i32, i32) {
    %c0_i32 = arith.constant 0 : i32
    %c0_i32_0 = arith.constant 0 : i32
    %c0_i32_1 = arith.constant 0 : i32
    %c0_i32_2 = arith.constant 0 : i32
    return %c0_i32, %c0_i32_0, %c0_i32_1 : i32, i32, i32
  }
  func.func @transform_5(%arg0: i32, %arg1: i32) -> (i32, i32) {
    %c0_i32 = arith.constant 0 : i32
    %c0_i32_0 = arith.constant 0 : i32
    %c0_i32_1 = arith.constant 0 : i32
    return %c0_i32, %c0_i32_0 : i32, i32
  }
  func.func @transform_6(%arg0: i32, %arg1: i32) -> (i32, i32) {
    %c0_i32 = arith.constant 0 : i32
    %c0_i32_0 = arith.constant 0 : i32
    %c0_i32_1 = arith.constant 0 : i32
    return %c0_i32, %c0_i32_0 : i32, i32
  }
  func.func @transform_7(%arg0: i32, %arg1: i32) -> (i32, i32, i32) {
    %c0_i32 = arith.constant 0 : i32
    %c0_i32_0 = arith.constant 0 : i32
    return %arg0, %c0_i32, %arg1 : i32, i32, i32
  }
}

</mosaic_0001>

<llo_original>
// kernel: tpu_custom_call.1
$region0: #{tpu_custom_call.1}
  #allocation0 [shape = 'u32[]', space=smem, size = 0x4, offset = 0x4, fixed_abs, tag = 'smem constant byte address 0x4 - core index']
  #allocation1 [shape = 'u32[144,128]{1,0:T(1,128)}', space=vmem, size = 0x12000, scoped, tag = 'internal scratch']
  #allocation2 [shape = 'bf16[48,128]{1,0:T(8,128)(2,1)}', space=vmem, size = 0x3000, scoped, tag = 'scratch operand']
  #allocation3 [shape = 'bf16[16,2]{1,0:T(8,128)(2,1)}', space=vmem, size = 0x1000, scoped, tag = 'scratch operand']
  #allocation4 [shape = 'bf16[16,4]{1,0:T(8,128)(2,1)}', space=vmem, size = 0x1000, scoped, tag = 'scratch operand']
  #allocation5 [shape = 'bf16[16,8]{1,0:T(8,128)(2,1)}', space=vmem, size = 0x1000, scoped, tag = 'scratch operand']
  %s0 = inlined_call_operand.vmem [shape: bf16[2,256,8], index: 0, kind: input, shape index: {}]
  %s1 = inlined_call_operand.vmem [shape: bf16[16,8], index: 1, kind: input, shape index: {}]
  %s2 = inlined_call_operand.vmem [shape: f32[16,1], index: 2, kind: input, shape index: {}]
  %s3 = inlined_call_operand.vmem [shape: bf16[3,16,48], index: 3, kind: input, shape index: {}]
  %s4 = inlined_call_operand.vmem [shape: f32[3,16,3], index: 4, kind: input, shape index: {}]
  %s5 = inlined_call_operand.vmem [shape: bf16[4,16], index: 5, kind: input, shape index: {}]
  %s6 = inlined_call_operand.vmem [shape: f32[4,1], index: 6, kind: input, shape index: {}]
  %s7 = inlined_call_operand.hbm [shape: f32[2,4,256], index: 7, kind: output, shape index: {}]
  %s8 = sld [smem:[#allocation0]]
  $region65: #{tpu_custom_call.1} parent=0
    _
  %s10 = ssub.s32 1, %s8
  %s11 = scalar_select 0, %s10, %s8
  $region1: #{tpu_custom_call.1} parent=0
    #allocation6 [shape = 'u8[4096]{0}', space=vmem, size = 0x1000, scoped, tag = 'output window, operand 0']
    #allocation7 [shape = 's32[2]{0}', space=sflag, size = 0x8, scoped, tag = 'scoped memory for tpu_custom_call.1']
    %12 = vsyncpa [#allocation7], 0
    %s13 = scalar_lea.sflag [#allocation7], 1
    %14 = vsyncpa %s13, 0
    loop: start=0, step=1, limit=6
    $region2: #{tpu_custom_call.1} parent=1 // loop_pre_header
      _
    $region3: #{tpu_custom_call.1} parent=1 // loop_header
      %s16 = sphi 0, %s20
      %p17 = scmp.ge.s32.totalorder %s16, 6
      %s23 = sphi 0, %s35
      %s24 = sphi 0, %s31
      %s25 = sphi 0, %s23
      %s26 = sphi 0, %s24
      %s27 = sphi 0, %s25
      %s28 = sphi 0, %s26
      %s40 = sphi 0, %s42
      %s43 = sphi 0, %s40
      %s44 = sphi 0, %s43
      %s60 = sphi 0, %s44
      %s64 = sphi 0, %s64
      %s66 = sphi 0, %s64
      %s67 = sphi 0, %s66
      %s81 = sphi 0, %s67
      %s85 = sphi 0, %s85
      %s87 = sphi 0, %s85
      %s88 = sphi 0, %s87
      %s102 = sphi 0, %s88
      %s106 = sphi 0, %s106
      %s108 = sphi 0, %s106
      %s109 = sphi 0, %s108
      %s123 = sphi 0, %s109
      %s127 = sphi 0, %s127
      %s129 = sphi 0, %s127
      %s130 = sphi 0, %s129
      %s144 = sphi 0, %s130
      %s148 = sphi 0, %s148
      %s150 = sphi 0, %s148
      %s151 = sphi 0, %s150
      %s165 = sphi 0, %s151
      %s169 = sphi 0, %s169
      %s171 = sphi 0, %s169
      %s172 = sphi 0, %s171
      %s186 = sphi 0, %s172
      %s194 = sphi 0, %s196
      %s197 = sphi 0, %s194
      %s198 = sphi 0, %s197
      %s214 = sphi 0, %s198
    $region4: #{tpu_custom_call.1} parent=1 // loop_header_branch
      %19 = sbr.rel (%p17) target = $region8
    $region5: #{tpu_custom_call.1} parent=1 // loop_body
      %s21 = ssub.s32 %s16, 1
      %s22 = ssub.s32 %s16, 2
      %s29 = sadd.s32 1, %s24
      %p30 = scmp.ge.s32.totalorder %s29, 2
      %s31 = scalar_select %p30, 0, %s29
      %s32 = sadd.s32 1, %s23
      %s33 = scalar_select %p30, %s32, %s23
      %p34 = scmp.ge.s32.totalorder %s33, 2
      %s35 = scalar_select %p34, 0, %s33
      %s36 = ssub.s32 %s23, %s35
      %s37 = ssub.s32 %s24, %s31
      %s38 = sor.u32 %s36, %s37
      %p39 = scmp.eq.s32.totalorder %s38, 0
      %s41 = sadd.s32 %s40, 1
      %s42 = scalar_select %p39, %s40, %s41
      %p45 = pneg %p39
      %p46 = scmp.eq.s32.totalorder %s16, 3
      %p47 = por %p45, %p46
      %p48 = scmp.ne.s32.totalorder %s40, %s43
      %p49 = scmp.eq.s32.totalorder %s16, 0
      %p50 = por %p48, %p49
      %p51 = scmp.ne.s32.totalorder %s40, %s43
      %p52 = scmp.eq.s32.totalorder %s21, 3
      %p53 = por %p51, %p52
      %p54 = scmp.ne.s32.totalorder %s43, %s44
      %p55 = scmp.eq.s32.totalorder %s21, 0
      %p56 = por %p54, %p55
      %p57 = scmp.ne.s32.totalorder %s43, %s44
      %p58 = scmp.eq.s32.totalorder %s22, 3
      %p59 = por %p57, %p58
      %p61 = scmp.ne.s32.totalorder %s44, %s60
      %p62 = scmp.eq.s32.totalorder %s22, 0
      %p63 = por %p61, %p62
      %s65 = sadd.s32 %s64, 1
      %p68 = scmp.eq.s32.totalorder %s16, 3
      %p69 = scmp.ne.s32.totalorder %s64, %s66
      %p70 = scmp.eq.s32.totalorder %s16, 0
      %p71 = por %p69, %p70
      %p72 = scmp.ne.s32.totalorder %s64, %s66
      %p73 = scmp.eq.s32.totalorder %s21, 3
      %p74 = por %p72, %p73
      %p75 = scmp.ne.s32.totalorder %s66, %s67
      %p76 = scmp.eq.s32.totalorder %s21, 0
      %p77 = por %p75, %p76
      %p78 = scmp.ne.s32.totalorder %s66, %s67
      %p79 = scmp.eq.s32.totalorder %s22, 3
      %p80 = por %p78, %p79
      %p82 = scmp.ne.s32.totalorder %s67, %s81
      %p83 = scmp.eq.s32.totalorder %s22, 0
      %p84 = por %p82, %p83
      %s86 = sadd.s32 %s85, 1
      %p89 = scmp.eq.s32.totalorder %s16, 3
      %p90 = scmp.ne.s32.totalorder %s85, %s87
      %p91 = scmp.eq.s32.totalorder %s16, 0
      %p92 = por %p90, %p91
      %p93 = scmp.ne.s32.totalorder %s85, %s87
      %p94 = scmp.eq.s32.totalorder %s21, 3
      %p95 = por %p93, %p94
      %p96 = scmp.ne.s32.totalorder %s87, %s88
      %p97 = scmp.eq.s32.totalorder %s21, 0
      %p98 = por %p96, %p97
      %p99 = scmp.ne.s32.totalorder %s87, %s88
      %p100 = scmp.eq.s32.totalorder %s22, 3
      %p101 = por %p99, %p100
      %p103 = scmp.ne.s32.totalorder %s88, %s102
      %p104 = scmp.eq.s32.totalorder %s22, 0
      %p105 = por %p103, %p104
      %s107 = sadd.s32 %s106, 1
      %p110 = scmp.eq.s32.totalorder %s16, 3
      %p111 = scmp.ne.s32.totalorder %s106, %s108
      %p112 = scmp.eq.s32.totalorder %s16, 0
      %p113 = por %p111, %p112
      %p114 = scmp.ne.s32.totalorder %s106, %s108
      %p115 = scmp.eq.s32.totalorder %s21, 3
      %p116 = por %p114, %p115
      %p117 = scmp.ne.s32.totalorder %s108, %s109
      %p118 = scmp.eq.s32.totalorder %s21, 0
      %p119 = por %p117, %p118
      %p120 = scmp.ne.s32.totalorder %s108, %s109
      %p121 = scmp.eq.s32.totalorder %s22, 3
      %p122 = por %p120, %p121
      %p124 = scmp.ne.s32.totalorder %s109, %s123
      %p125 = scmp.eq.s32.totalorder %s22, 0
      %p126 = por %p124, %p125
      %s128 = sadd.s32 %s127, 1
      %p131 = scmp.eq.s32.totalorder %s16, 3
      %p132 = scmp.ne.s32.totalorder %s127, %s129
      %p133 = scmp.eq.s32.totalorder %s16, 0
      %p134 = por %p132, %p133
      %p135 = scmp.ne.s32.totalorder %s127, %s129
      %p136 = scmp.eq.s32.totalorder %s21, 3
      %p137 = por %p135, %p136
      %p138 = scmp.ne.s32.totalorder %s129, %s130
      %p139 = scmp.eq.s32.totalorder %s21, 0
      %p140 = por %p138, %p139
      %p141 = scmp.ne.s32.totalorder %s129, %s130
      %p142 = scmp.eq.s32.totalorder %s22, 3
      %p143 = por %p141, %p142
      %p145 = scmp.ne.s32.totalorder %s130, %s144
      %p146 = scmp.eq.s32.totalorder %s22, 0
      %p147 = por %p145, %p146
      %s149 = sadd.s32 %s148, 1
      %p152 = scmp.eq.s32.totalorder %s16, 3
      %p153 = scmp.ne.s32.totalorder %s148, %s150
      %p154 = scmp.eq.s32.totalorder %s16, 0
      %p155 = por %p153, %p154
      %p156 = scmp.ne.s32.totalorder %s148, %s150
      %p157 = scmp.eq.s32.totalorder %s21, 3
      %p158 = por %p156, %p157
      %p159 = scmp.ne.s32.totalorder %s150, %s151
      %p160 = scmp.eq.s32.totalorder %s21, 0
      %p161 = por %p159, %p160
      %p162 = scmp.ne.s32.totalorder %s150, %s151
      %p163 = scmp.eq.s32.totalorder %s22, 3
      %p164 = por %p162, %p163
      %p166 = scmp.ne.s32.totalorder %s151, %s165
      %p167 = scmp.eq.s32.totalorder %s22, 0
      %p168 = por %p166, %p167
      %s170 = sadd.s32 %s169, 1
      %p173 = scmp.eq.s32.totalorder %s16, 3
      %p174 = scmp.ne.s32.totalorder %s169, %s171
      %p175 = scmp.eq.s32.totalorder %s16, 0
      %p176 = por %p174, %p175
      %p177 = scmp.ne.s32.totalorder %s169, %s171
      %p178 = scmp.eq.s32.totalorder %s21, 3
      %p179 = por %p177, %p178
      %p180 = scmp.ne.s32.totalorder %s171, %s172
      %p181 = scmp.eq.s32.totalorder %s21, 0
      %p182 = por %p180, %p181
      %p183 = scmp.ne.s32.totalorder %s171, %s172
      %p184 = scmp.eq.s32.totalorder %s22, 3
      %p185 = por %p183, %p184
      %p187 = scmp.ne.s32.totalorder %s172, %s186
      %p188 = scmp.eq.s32.totalorder %s22, 0
      %p189 = por %p187, %p188
      %s190 = ssub.s32 %s23, %s35
      %s191 = ssub.s32 %s24, %s31
      %s192 = sor.u32 %s190, %s191
      %p193 = scmp.eq.s32.totalorder %s192, 0
      %s195 = sadd.s32 %s194, 1
      %s196 = scalar_select %p193, %s194, %s195
      %p199 = pneg %p193
      %p200 = scmp.eq.s32.totalorder %s16, 3
      %p201 = por %p199, %p200
      %p202 = scmp.ne.s32.totalorder %s194, %s197
      %p203 = scmp.eq.s32.totalorder %s16, 0
      %p204 = por %p202, %p203
      %p205 = scmp.ne.s32.totalorder %s194, %s197
      %p206 = scmp.eq.s32.totalorder %s21, 3
      %p207 = por %p205, %p206
      %p208 = scmp.ne.s32.totalorder %s197, %s198
      %p209 = scmp.eq.s32.totalorder %s21, 0
      %p210 = por %p208, %p209
      %p211 = scmp.ne.s32.totalorder %s197, %s198
      %p212 = scmp.eq.s32.totalorder %s22, 3
      %p213 = por %p211, %p212
      %p215 = scmp.ne.s32.totalorder %s198, %s214
      %p216 = scmp.eq.s32.totalorder %s22, 0
      %p217 = por %p215, %p216
      %p218 = scmp.le.s32.totalorder 1, %s16
      %p219 = scmp.lt.s32.totalorder %s16, 5
      %p220 = pnand %p218, %p219
      %p221 = pneg %p220
      // Predicated region
      $region9: #{tpu_custom_call.1} parent=5 // pred_check
        _
      $region10: #{tpu_custom_call.1} parent=5 // pred_check_branch
        %223 = sbr.rel (%p220) target = $region12
      $region11: #{tpu_custom_call.1} parent=5 // pred_region
        %s224 = ssub.s32 %s16, 1
        // Predicated region
        $region13: #{tpu_custom_call.1} parent=11 // pred_check
          %p225 = pneg %p77
        $region14: #{tpu_custom_call.1} parent=11 // pred_check_branch
          %227 = sbr.rel (%p225) target = $region16
        $region15: #{tpu_custom_call.1} parent=11 // pred_region
          _
        $region16: #{tpu_custom_call.1} parent=11 // pred_fallthru
          _
        // Predicated region
        $region17: #{tpu_custom_call.1} parent=11 // pred_check
          %p228 = pneg %p98
        $region18: #{tpu_custom_call.1} parent=11 // pred_check_branch
          %230 = sbr.rel (%p228) target = $region20
        $region19: #{tpu_custom_call.1} parent=11 // pred_region
          _
        $region20: #{tpu_custom_call.1} parent=11 // pred_fallthru
          _
        // Predicated region
        $region21: #{tpu_custom_call.1} parent=11 // pred_check
          %p231 = pneg %p119
        $region22: #{tpu_custom_call.1} parent=11 // pred_check_branch
          %233 = sbr.rel (%p231) target = $region24
        $region23: #{tpu_custom_call.1} parent=11 // pred_region
          _
        $region24: #{tpu_custom_call.1} parent=11 // pred_fallthru
          _
        // Predicated region
        $region25: #{tpu_custom_call.1} parent=11 // pred_check
          %p234 = pneg %p140
        $region26: #{tpu_custom_call.1} parent=11 // pred_check_branch
          %236 = sbr.rel (%p234) target = $region28
        $region27: #{tpu_custom_call.1} parent=11 // pred_region
          _
        $region28: #{tpu_custom_call.1} parent=11 // pred_fallthru
          _
        // Predicated region
        $region29: #{tpu_custom_call.1} parent=11 // pred_check
          %p237 = pneg %p161
        $region30: #{tpu_custom_call.1} parent=11 // pred_check_branch
          %239 = sbr.rel (%p237) target = $region32
        $region31: #{tpu_custom_call.1} parent=11 // pred_region
          _
        $region32: #{tpu_custom_call.1} parent=11 // pred_fallthru
          _
        // Predicated region
        $region33: #{tpu_custom_call.1} parent=11 // pred_check
          %p240 = pneg %p182
        $region34: #{tpu_custom_call.1} parent=11 // pred_check_branch
          %242 = sbr.rel (%p240) target = $region36
        $region35: #{tpu_custom_call.1} parent=11 // pred_region
          _
        $region36: #{tpu_custom_call.1} parent=11 // pred_fallthru
          _
      $region12: #{tpu_custom_call.1} parent=5 // pred_fallthru
        _
      %p243 = scmp.lt.s32.totalorder %s16, 4
      // Predicated region
      $region37: #{tpu_custom_call.1} parent=5 // pred_check
        %p244 = pneg %p243
      $region38: #{tpu_custom_call.1} parent=5 // pred_check_branch
        %246 = sbr.rel (%p244) target = $region40
      $region39: #{tpu_custom_call.1} parent=5 // pred_region
        // Predicated region
        $region41: #{tpu_custom_call.1} parent=39 // pred_check
          %p247 = pneg %p50
        $region42: #{tpu_custom_call.1} parent=39 // pred_check_branch
          %249 = sbr.rel (%p247) target = $region44
        $region43: #{tpu_custom_call.1} parent=39 // pred_region
          %s250 = smul.u32 16, %s24
          %p251 = scmp.lt.s32.totalorder %s23, 1
          %s252 = scalar_select %p251, %s23, 1
          %p253 = scmp.lt.s32.totalorder %s250, 31
          %s254 = scalar_select %p253, %s250, 31
          %s255 = smul.addr %s252, 32
          %s256 = sadd.s32 %s254, %s255
          %s257 = smul.addr %s256, 4
          %s258 = scalar_lea.vmem %s0, %s257
          %s259 = smul.u32 16, %s24
        $region44: #{tpu_custom_call.1} parent=39 // pred_fallthru
          _
      $region40: #{tpu_custom_call.1} parent=5 // pred_fallthru
        _
      %p260 = scmp.le.s32.totalorder 1, %s16
      %p261 = scmp.lt.s32.totalorder %s16, 5
      %p262 = pnand %p260, %p261
      %p263 = pneg %p262
      // Predicated region
      $region45: #{tpu_custom_call.1} parent=5 // pred_check
        _
      $region46: #{tpu_custom_call.1} parent=5 // pred_check_branch
        %265 = sbr.rel (%p262) target = $region48
      $region47: #{tpu_custom_call.1} parent=5 // pred_region
        %s266 = ssub.s32 %s16, 1
        %s267 = smul.u32 16, %s26
        %p268 = scmp.lt.s32.totalorder %s25, 1
        %s269 = scalar_select %p268, %s25, 1
        %p270 = scmp.lt.s32.totalorder %s267, 31
        %s271 = scalar_select %p270, %s267, 31
        %s272 = smul.addr %s269, 32
        %s273 = sadd.s32 %s271, %s272
        %s274 = smul.addr %s273, 4
        %s275 = scalar_lea.vmem %s0, %s274
        %p276 = pneg %p56
        %p277 = pneg %p53
        %p278 = pneg %p77
        %p279 = pneg %p74
        %p280 = pneg %p98
        %p281 = pneg %p95
        %p282 = pneg %p119
        %p283 = pneg %p116
        %p284 = pneg %p140
        %p285 = pneg %p137
        %p286 = pneg %p161
        %p287 = pneg %p158
        %p288 = pneg %p182
        %p289 = pneg %p179
        %p290 = pneg %p210
        %p291 = pneg %p207
        %s292 = sand.u32 %s197, 1
        %s293 = scalar_lea.sflag [#allocation7], %s292
        %s294 = sand.u32 %s197, 1
        %s295 = smul.addr %s294, 4
        %s296 = scalar_lea.vmem [#allocation6], %s295
        %s297 = smul.u32 16, %s26
        %p298 = scmp.lt.s32.totalorder %s25, 1
        %s299 = scalar_select %p298, %s25, 1
        %p300 = scmp.lt.s32.totalorder %s297, 31
        %s301 = scalar_select %p300, %s297, 31
        %s302 = smul.addr %s299, 32
        %s303 = sadd.s32 %s301, %s302
        %s304 = smul.addr %s303, 4
        %s305 = scalar_lea.vmem %s0, %s304
        %s306 = smul.u32 16, %s26
        %p308 = scmp.eq.s32.totalorder %s26, 0
        // Predicated region
        $region49: #{tpu_custom_call.1} parent=47 // pred_check
          %p309 = pneg %p308
        $region50: #{tpu_custom_call.1} parent=47 // pred_check_branch
          %311 = sbr.rel (%p309) target = $region52
        $region51: #{tpu_custom_call.1} parent=47 // pred_region
          %vm312 = vcmask 11264
          %313 = vst.msk [vmem:[#allocation3] sm:$0xf] %vm312, 0
          %314 = vst.msk [vmem:[#allocation3 + $0x4] sm:$0xf] %vm312, 0
          %vm315 = vcmask 27648
          %316 = vst.msk [vmem:[#allocation4] sm:$0xf] %vm315, 0
          %317 = vst.msk [vmem:[#allocation4 + $0x4] sm:$0xf] %vm315, 0
          %vm318 = vcmask 60416
          %319 = vst.msk [vmem:[#allocation5] sm:$0xf] %vm318, 0
          %320 = vst.msk [vmem:[#allocation5 + $0x4] sm:$0xf] %vm318, 0
        $region52: #{tpu_custom_call.1} parent=47 // pred_fallthru
          _
        %v321 = vld [vmem:[%s1] sm:$0xf]
        %v322 = vld [vmem:[%s1 + $0x4] sm:$0xf]
        %v323 = vld [vmem:[%s305] sm:$0xf]
        %v324 = vld [vmem:[%s305 + $0x4] sm:$0xf]
        %v325 = vld [vmem:[%s305 + $0x8] sm:$0xf]
        %v326 = vld [vmem:[%s305 + $0xc] sm:$0xf]
        %v327 = vld [vmem:[%s305 + $0x10] sm:$0xf]
        %v328 = vld [vmem:[%s305 + $0x14] sm:$0xf]
        %v329 = vld [vmem:[%s305 + $0x18] sm:$0xf]
        %v330 = vld [vmem:[%s305 + $0x1c] sm:$0xf]
        %v331 = vld [vmem:[%s305 + $0x20] sm:$0xf]
        %v332 = vld [vmem:[%s305 + $0x24] sm:$0xf]
        %v333 = vld [vmem:[%s305 + $0x28] sm:$0xf]
        %v334 = vld [vmem:[%s305 + $0x2c] sm:$0xf]
        %v335 = vld [vmem:[%s305 + $0x30] sm:$0xf]
        %v336 = vld [vmem:[%s305 + $0x34] sm:$0xf]
        %v337 = vld [vmem:[%s305 + $0x38] sm:$0xf]
        %v338 = vld [vmem:[%s305 + $0x3c] sm:$0xf]
        %v339 = vld [vmem:[%s2] sm:$0xff]
        %v340 = vld [vmem:[%s2 + $0x8] sm:$0xff]
        %342 = vset.pattern.permute.xlu0 0
        %343 = vperm.xlu0 %342, %v339
        %v344 = vpop.permute.xlu0 %343
        %347 = vset.pattern.permute.xlu0 0
        %348 = vperm.xlu0 %347, %v340
        %v349 = vpop.permute.xlu0 %348
        %v353 = vunpack.c.l.b16 %v321
        %v354 = vunpack.c.l.b16 %v322
        %v355 = vpack.c.b16 %v354, %v353
        %v372 = vunpack.c.l.b16 %v323
        %v373 = vunpack.c.l.b16 %v324
        %v374 = vunpack.c.l.b16 %v325
        %v375 = vunpack.c.l.b16 %v326
        %v376 = vunpack.c.l.b16 %v327
        %v377 = vunpack.c.l.b16 %v328
        %v378 = vunpack.c.l.b16 %v329
        %v379 = vunpack.c.l.b16 %v330
        %v380 = vunpack.c.l.b16 %v331
        %v381 = vunpack.c.l.b16 %v332
        %v382 = vunpack.c.l.b16 %v333
        %v383 = vunpack.c.l.b16 %v334
        %v384 = vunpack.c.l.b16 %v335
        %v385 = vunpack.c.l.b16 %v336
        %v386 = vunpack.c.l.b16 %v337
        %v387 = vunpack.c.l.b16 %v338
        %v388 = vpack.c.b16 %v373, %v372
        %v389 = vpack.c.b16 %v375, %v374
        %v390 = vpack.c.b16 %v377, %v376
        %v391 = vpack.c.b16 %v379, %v378
        %v392 = vpack.c.b16 %v381, %v380
        %v393 = vpack.c.b16 %v383, %v382
        %v394 = vpack.c.b16 %v385, %v384
        %v395 = vpack.c.b16 %v387, %v386
        %vm396 = vcmask 64512
        %v398 = vsel %vm396, %v355, 0
        %v401 = vsel %vm396, %v388, 0
        %v404 = vsel %vm396, %v389, 0
        %v407 = vsel %vm396, %v390, 0
        %v410 = vsel %vm396, %v391, 0
        %v413 = vsel %vm396, %v392, 0
        %v416 = vsel %vm396, %v393, 0
        %v419 = vsel %vm396, %v394, 0
        %v422 = vsel %vm396, %v395, 0
        %424 = vmatprep.subr.bf16.mxu0 0
        %425 = vmatpush1.bf16.xpose.msra.mxu0 %v422
        %426 = vmatprep.subr.bf16.mxu0 0
        %427 = vmatpush1.bf16.xpose.msra.mxu0 %v419
        %428 = vmatprep.subr.bf16.mxu0 0
        %429 = vmatpush1.bf16.xpose.msra.mxu0 %v416
        %430 = vmatprep.subr.bf16.mxu0 0
        %431 = vmatpush1.bf16.xpose.msra.mxu0 %v413
        %432 = vmatprep.subr.bf16.mxu0 0
        %433 = vmatpush1.bf16.xpose.msra.mxu0 %v410
        %434 = vmatprep.subr.bf16.mxu0 0
        %435 = vmatpush1.bf16.xpose.msra.mxu0 %v407
        %436 = vmatprep.subr.bf16.mxu0 0
        %437 = vmatpush1.bf16.xpose.msra.mxu0 %v404
        %438 = vmatprep.subr.bf16.mxu0 0
        %439 = vmatpush1.bf16.xpose.msra.mxu0 %v401
        %440 = vmatprep.subr.bf16.mxu0 0
        %441 = vmatpush2.bf16.xpose.msra.mxu0 0
        %442 = vmatprep.subr.bf16.mxu0 0
        %443 = vmatpush2.bf16.xpose.msra.mxu0 0
        %444 = vmatprep.subr.bf16.mxu0 0
        %445 = vmatpush2.bf16.xpose.msra.mxu0 0
        %446 = vmatprep.subr.bf16.mxu0 0
        %447 = vmatpush2.bf16.xpose.msra.mxu0 0
        %448 = vmatprep.subr.bf16.mxu0 0
        %449 = vmatpush2.bf16.xpose.msra.mxu0 0
        %450 = vmatprep.subr.bf16.mxu0 0
        %451 = vmatpush2.bf16.xpose.msra.mxu0 0
        %452 = vmatprep.subr.bf16.mxu0 0
        %453 = vmatpush2.bf16.xpose.msra.mxu0 0
        %454 = vmatprep.subr.bf16.mxu0 0
        %455 = vmatpush2.bf16.xpose.msra.mxu0 0
        %456 = vmatprep.mubr.bf16.mxu0 0
        %457 = vmatmul.mubr.bf16.gmra.mxu0 %v398
        %v458 = vpop.f32.mrf.mxu0
        %v459 = vadd.f32 %v344, %v458
        %v460 = vpop.f32.mrf.mxu0
        %v461 = vpop.f32.mrf.mxu0
        %v462 = vadd.f32 %v349, %v461
        %v463 = vpop.f32.mrf.mxu0
        %464 = vdwg.mxu0
        %v465 = vld [vmem:[#allocation3] sm:$0xf]
        %v466 = vld [vmem:[#allocation3 + $0x4] sm:$0xf]
        %v467 = vpack.c.bf16 %v462, %v459
        %vm468 = vcmask 11264
        %469 = vst.msk [vmem:[#allocation2] sm:$0xf] %vm468, %v465
        %470 = vst.msk [vmem:[#allocation2 + $0x4] sm:$0xf] %vm468, %v466
        %v472 = vunpack.c.l.b16 %v467
        %v473 = vunpack.c.h.b16 %v467
        %v474 = vpack.c.b16 %v472, %v472
        %v475 = vpack.c.b16 %v473, %v473
        %476 = vrot.lane.b32.xlu0 %v474, 2
        %v477 = vpop.permute.xlu0 %476
        %478 = vrot.lane.b32.xlu0 %v475, 2
        %v479 = vpop.permute.xlu0 %478
        %vm482 = vcmask 1043472
        %483 = vst.msk [vmem:[#allocation2] sm:$0xf] %vm482, %v477
        %484 = vst.msk [vmem:[#allocation2 + $0x4] sm:$0xf] %vm482, %v479
        %487 = vrot.lane.b32.xlu0 %v465, 127
        %v488 = vpop.permute.xlu0 %487
        %489 = vrot.lane.b32.xlu0 %v466, 127
        %v490 = vpop.permute.xlu0 %489
        %vm493 = vcmask 3072
        %494 = vst.msk [vmem:[#allocation2 + $0x8] sm:$0xf] %vm493, %v488
        %495 = vst.msk [vmem:[#allocation2 + $0xc] sm:$0xf] %vm493, %v490
        %496 = vrot.lane.b32.xlu0 %v474, 1
        %v497 = vpop.permute.xlu0 %496
        %498 = vrot.lane.b32.xlu0 %v475, 1
        %v499 = vpop.permute.xlu0 %498
        %vm502 = vcmask 1043464
        %503 = vst.msk [vmem:[#allocation2 + $0x8] sm:$0xf] %vm502, %v497
        %504 = vst.msk [vmem:[#allocation2 + $0xc] sm:$0xf] %vm502, %v499
        %507 = vst [vmem:[#allocation2 + $0x10] sm:$0xf] %v474
        %508 = vst [vmem:[#allocation2 + $0x14] sm:$0xf] %v475
        %509 = vst.msk [vmem:[#allocation3] sm:$0xf] %vm468, %v477
        %510 = vst.msk [vmem:[#allocation3 + $0x4] sm:$0xf] %vm468, %v479
        %v511 = vld [vmem:[%s3] sm:$0xf]
        %v512 = vld [vmem:[%s3 + $0x4] sm:$0xf]
        %v513 = vld [vmem:[#allocation2] sm:$0xf]
        %v514 = vld [vmem:[#allocation2 + $0x4] sm:$0xf]
        %v515 = vld [vmem:[#allocation2 + $0x8] sm:$0xf]
        %v516 = vld [vmem:[#allocation2 + $0xc] sm:$0xf]
        %v517 = vld [vmem:[#allocation2 + $0x10] sm:$0xf]
        %v518 = vld [vmem:[#allocation2 + $0x14] sm:$0xf]
        %v519 = vld [vmem:[%s4] sm:$0xff]
        %v520 = vld [vmem:[%s4 + $0x8] sm:$0xff]
        %522 = vset.pattern.permute.xlu0 0
        %523 = vperm.xlu0 %522, %v519
        %v524 = vpop.permute.xlu0 %523
        %527 = vset.pattern.permute.xlu0 0
        %528 = vperm.xlu0 %527, %v520
        %v529 = vpop.permute.xlu0 %528
        %v533 = vunpack.c.l.b16 %v511
        %v534 = vunpack.c.l.b16 %v512
        %v535 = vpack.c.b16 %v534, %v533
        %v542 = vunpack.c.l.b16 %v513
        %v543 = vunpack.c.l.b16 %v514
        %v544 = vunpack.c.l.b16 %v515
        %v545 = vunpack.c.l.b16 %v516
        %v546 = vunpack.c.l.b16 %v517
        %v547 = vunpack.c.l.b16 %v518
        %v548 = vpack.c.b16 %v543, %v542
        %v549 = vpack.c.b16 %v545, %v544
        %v550 = vpack.c.b16 %v547, %v546
        %vm554 = vcmask 392192
        %v556 = vsel %vm554, %v535, 0
        %558 = vmatprep.subr.bf16.mxu0 0
        %559 = vmatpush1.bf16.msra.mxu0 0
        %560 = vmatprep.subr.bf16.mxu0 0
        %561 = vmatpush1.bf16.msra.mxu0 0
        %562 = vmatprep.subr.bf16.mxu0 0
        %563 = vmatpush1.bf16.msra.mxu0 0
        %564 = vmatprep.subr.bf16.mxu0 0
        %565 = vmatpush1.bf16.msra.mxu0 0
        %566 = vmatprep.subr.bf16.mxu0 0
        %567 = vmatpush1.bf16.msra.mxu0 0
        %568 = vmatprep.subr.bf16.mxu0 0
        %569 = vmatpush1.bf16.msra.mxu0 %v550
        %570 = vmatprep.subr.bf16.mxu0 0
        %571 = vmatpush1.bf16.msra.mxu0 %v549
        %572 = vmatprep.subr.bf16.mxu0 0
        %573 = vmatpush1.bf16.msra.mxu0 %v548
        %574 = vmatprep.subr.bf16.mxu0 0
        %575 = vmatpush2.bf16.msra.mxu0 0
        %576 = vmatprep.subr.bf16.mxu0 0
        %577 = vmatpush2.bf16.msra.mxu0 0
        %578 = vmatprep.subr.bf16.mxu0 0
        %579 = vmatpush2.bf16.msra.mxu0 0
        %580 = vmatprep.subr.bf16.mxu0 0
        %581 = vmatpush2.bf16.msra.mxu0 0
        %582 = vmatprep.subr.bf16.mxu0 0
        %583 = vmatpush2.bf16.msra.mxu0 0
        %584 = vmatprep.subr.bf16.mxu0 0
        %585 = vmatpush2.bf16.msra.mxu0 0
        %586 = vmatprep.subr.bf16.mxu0 0
        %587 = vmatpush2.bf16.msra.mxu0 0
        %588 = vmatprep.subr.bf16.mxu0 0
        %589 = vmatpush2.bf16.msra.mxu0 0
        %590 = vmatprep.mubr.bf16.mxu0 0
        %591 = vmatmul.mubr.bf16.gmra.mxu0 %v556
        %v592 = vpop.f32.mrf.mxu0
        %v593 = vadd.f32 %v524, %v592
        %v594 = vpop.f32.mrf.mxu0
        %v595 = vpop.f32.mrf.mxu0
        %v596 = vadd.f32 %v529, %v595
        %v597 = vpop.f32.mrf.mxu0
        %598 = vdwg.mxu0
        %v599 = vmax.f32 %v593, 0.0
        %v600 = vmax.f32 %v596, 0.0
        %601 = vset.pattern.permute.xlu0 1
        %602 = vperm.xlu0 %601, %v519
        %v603 = vpop.permute.xlu0 %602
        %605 = vset.pattern.permute.xlu0 1
        %606 = vperm.xlu0 %605, %v520
        %v607 = vpop.permute.xlu0 %606
        %v609 = vmul.f32 %v599, %v603
        %v610 = vmul.f32 %v600, %v607
        %611 = vset.pattern.permute.xlu0 2
        %612 = vperm.xlu0 %611, %v519
        %v613 = vpop.permute.xlu0 %612
        %615 = vset.pattern.permute.xlu0 2
        %616 = vperm.xlu0 %615, %v520
        %v617 = vpop.permute.xlu0 %616
        %v619 = vadd.f32 %v609, %v613
        %v620 = vadd.f32 %v610, %v617
        %v621 = vadd.f32 %v619, %v459
        %v622 = vadd.f32 %v620, %v462
        %v623 = vmax.f32 %v621, 0.0
        %v624 = vmax.f32 %v622, 0.0
        %v625 = vld [vmem:[#allocation4] sm:$0xf]
        %v626 = vld [vmem:[#allocation4 + $0x4] sm:$0xf]
        %v627 = vpack.c.bf16 %v624, %v623
        %vm628 = vcmask 27648
        %629 = vst.msk [vmem:[#allocation2] sm:$0xf] %vm628, %v625
        %630 = vst.msk [vmem:[#allocation2 + $0x4] sm:$0xf] %vm628, %v626
        %v632 = vunpack.c.l.b16 %v627
        %v633 = vunpack.c.h.b16 %v627
        %v634 = vpack.c.b16 %v632, %v632
        %v635 = vpack.c.b16 %v633, %v633
        %636 = vrot.lane.b32.xlu0 %v634, 4
        %v637 = vpop.permute.xlu0 %636
        %638 = vrot.lane.b32.xlu0 %v635, 4
        %v639 = vpop.permute.xlu0 %638
        %vm642 = vcmask 1043488
        %643 = vst.msk [vmem:[#allocation2] sm:$0xf] %vm642, %v637
        %644 = vst.msk [vmem:[#allocation2 + $0x4] sm:$0xf] %vm642, %v639
        %647 = vrot.lane.b32.xlu0 %v625, 126
        %v648 = vpop.permute.xlu0 %647
        %649 = vrot.lane.b32.xlu0 %v626, 126
        %v650 = vpop.permute.xlu0 %649
        %653 = vst.msk [vmem:[#allocation2 + $0x8] sm:$0xf] %vm468, %v648
        %654 = vst.msk [vmem:[#allocation2 + $0xc] sm:$0xf] %vm468, %v650
        %655 = vrot.lane.b32.xlu0 %v634, 2
        %v656 = vpop.permute.xlu0 %655
        %657 = vrot.lane.b32.xlu0 %v635, 2
        %v658 = vpop.permute.xlu0 %657
        %661 = vst.msk [vmem:[#allocation2 + $0x8] sm:$0xf] %vm482, %v656
        %662 = vst.msk [vmem:[#allocation2 + $0xc] sm:$0xf] %vm482, %v658
        %665 = vst [vmem:[#allocation2 + $0x10] sm:$0xf] %v634
        %666 = vst [vmem:[#allocation2 + $0x14] sm:$0xf] %v635
        %667 = vst.msk [vmem:[#allocation4] sm:$0xf] %vm628, %v637
        %668 = vst.msk [vmem:[#allocation4 + $0x4] sm:$0xf] %vm628, %v639
        %s669 = scalar_lea.vmem %s3, 8
        %v670 = vld [vmem:[%s669] sm:$0xf]
        %v671 = vld [vmem:[%s669 + $0x4] sm:$0xf]
        %v672 = vld [vmem:[#allocation2] sm:$0xf]
        %v673 = vld [vmem:[#allocation2 + $0x4] sm:$0xf]
        %v674 = vld [vmem:[#allocation2 + $0x8] sm:$0xf]
        %v675 = vld [vmem:[#allocation2 + $0xc] sm:$0xf]
        %v676 = vld [vmem:[#allocation2 + $0x10] sm:$0xf]
        %v677 = vld [vmem:[#allocation2 + $0x14] sm:$0xf]
        %s678 = scalar_lea.vmem %s4, 16
        %v679 = vld [vmem:[%s678] sm:$0xff]
        %v680 = vld [vmem:[%s678 + $0x8] sm:$0xff]
        %682 = vset.pattern.permute.xlu0 0
        %683 = vperm.xlu0 %682, %v679
        %v684 = vpop.permute.xlu0 %683
        %687 = vset.pattern.permute.xlu0 0
        %688 = vperm.xlu0 %687, %v680
        %v689 = vpop.permute.xlu0 %688
        %v693 = vunpack.c.l.b16 %v670
        %v694 = vunpack.c.l.b16 %v671
        %v695 = vpack.c.b16 %v694, %v693
        %v702 = vunpack.c.l.b16 %v672
        %v703 = vunpack.c.l.b16 %v673
        %v704 = vunpack.c.l.b16 %v674
        %v705 = vunpack.c.l.b16 %v675
        %v706 = vunpack.c.l.b16 %v676
        %v707 = vunpack.c.l.b16 %v677
        %v708 = vpack.c.b16 %v703, %v702
        %v709 = vpack.c.b16 %v705, %v704
        %v710 = vpack.c.b16 %v707, %v706
        %v715 = vsel %vm554, %v695, 0
        %717 = vmatprep.subr.bf16.mxu0 0
        %718 = vmatpush1.bf16.msra.mxu0 0
        %719 = vmatprep.subr.bf16.mxu0 0
        %720 = vmatpush1.bf16.msra.mxu0 0
        %721 = vmatprep.subr.bf16.mxu0 0
        %722 = vmatpush1.bf16.msra.mxu0 0
        %723 = vmatprep.subr.bf16.mxu0 0
        %724 = vmatpush1.bf16.msra.mxu0 0
        %725 = vmatprep.subr.bf16.mxu0 0
        %726 = vmatpush1.bf16.msra.mxu0 0
        %727 = vmatprep.subr.bf16.mxu0 0
        %728 = vmatpush1.bf16.msra.mxu0 %v710
        %729 = vmatprep.subr.bf16.mxu0 0
        %730 = vmatpush1.bf16.msra.mxu0 %v709
        %731 = vmatprep.subr.bf16.mxu0 0
        %732 = vmatpush1.bf16.msra.mxu0 %v708
        %733 = vmatprep.subr.bf16.mxu0 0
        %734 = vmatpush2.bf16.msra.mxu0 0
        %735 = vmatprep.subr.bf16.mxu0 0
        %736 = vmatpush2.bf16.msra.mxu0 0
        %737 = vmatprep.subr.bf16.mxu0 0
        %738 = vmatpush2.bf16.msra.mxu0 0
        %739 = vmatprep.subr.bf16.mxu0 0
        %740 = vmatpush2.bf16.msra.mxu0 0
        %741 = vmatprep.subr.bf16.mxu0 0
        %742 = vmatpush2.bf16.msra.mxu0 0
        %743 = vmatprep.subr.bf16.mxu0 0
        %744 = vmatpush2.bf16.msra.mxu0 0
        %745 = vmatprep.subr.bf16.mxu0 0
        %746 = vmatpush2.bf16.msra.mxu0 0
        %747 = vmatprep.subr.bf16.mxu0 0
        %748 = vmatpush2.bf16.msra.mxu0 0
        %749 = vmatprep.mubr.bf16.mxu0 0
        %750 = vmatmul.mubr.bf16.gmra.mxu0 %v715
        %v751 = vpop.f32.mrf.mxu0
        %v752 = vadd.f32 %v684, %v751
        %v753 = vpop.f32.mrf.mxu0
        %v754 = vpop.f32.mrf.mxu0
        %v755 = vadd.f32 %v689, %v754
        %v756 = vpop.f32.mrf.mxu0
        %757 = vdwg.mxu0
        %v758 = vmax.f32 %v752, 0.0
        %v759 = vmax.f32 %v755, 0.0
        %760 = vset.pattern.permute.xlu0 1
        %761 = vperm.xlu0 %760, %v679
        %v762 = vpop.permute.xlu0 %761
        %764 = vset.pattern.permute.xlu0 1
        %765 = vperm.xlu0 %764, %v680
        %v766 = vpop.permute.xlu0 %765
        %v768 = vmul.f32 %v758, %v762
        %v769 = vmul.f32 %v759, %v766
        %770 = vset.pattern.permute.xlu0 2
        %771 = vperm.xlu0 %770, %v679
        %v772 = vpop.permute.xlu0 %771
        %774 = vset.pattern.permute.xlu0 2
        %775 = vperm.xlu0 %774, %v680
        %v776 = vpop.permute.xlu0 %775
        %v778 = vadd.f32 %v768, %v772
        %v779 = vadd.f32 %v769, %v776
        %v780 = vadd.f32 %v778, %v623
        %v781 = vadd.f32 %v779, %v624
        %v782 = vmax.f32 %v780, 0.0
        %v783 = vmax.f32 %v781, 0.0
        %v784 = vld [vmem:[#allocation5] sm:$0xf]
        %v785 = vld [vmem:[#allocation5 + $0x4] sm:$0xf]
        %v786 = vpack.c.bf16 %v783, %v782
        %vm787 = vcmask 60416
        %788 = vst.msk [vmem:[#allocation2] sm:$0xf] %vm787, %v784
        %789 = vst.msk [vmem:[#allocation2 + $0x4] sm:$0xf] %vm787, %v785
        %v791 = vunpack.c.l.b16 %v786
        %v792 = vunpack.c.h.b16 %v786
        %v793 = vpack.c.b16 %v791, %v791
        %v794 = vpack.c.b16 %v792, %v792
        %795 = vrot.lane.b32.xlu0 %v793, 8
        %v796 = vpop.permute.xlu0 %795
        %797 = vrot.lane.b32.xlu0 %v794, 8
        %v798 = vpop.permute.xlu0 %797
        %vm801 = vcmask 1043520
        %802 = vst.msk [vmem:[#allocation2] sm:$0xf] %vm801, %v796
        %803 = vst.msk [vmem:[#allocation2 + $0x4] sm:$0xf] %vm801, %v798
        %806 = vrot.lane.b32.xlu0 %v784, 124
        %v807 = vpop.permute.xlu0 %806
        %808 = vrot.lane.b32.xlu0 %v785, 124
        %v809 = vpop.permute.xlu0 %808
        %812 = vst.msk [vmem:[#allocation2 + $0x8] sm:$0xf] %vm628, %v807
        %813 = vst.msk [vmem:[#allocation2 + $0xc] sm:$0xf] %vm628, %v809
        %814 = vrot.lane.b32.xlu0 %v793, 4
        %v815 = vpop.permute.xlu0 %814
        %816 = vrot.lane.b32.xlu0 %v794, 4
        %v817 = vpop.permute.xlu0 %816
        %820 = vst.msk [vmem:[#allocation2 + $0x8] sm:$0xf] %vm642, %v815
        %821 = vst.msk [vmem:[#allocation2 + $0xc] sm:$0xf] %vm642, %v817
        %824 = vst [vmem:[#allocation2 + $0x10] sm:$0xf] %v793
        %825 = vst [vmem:[#allocation2 + $0x14] sm:$0xf] %v794
        %826 = vst.msk [vmem:[#allocation5] sm:$0xf] %vm787, %v796
        %827 = vst.msk [vmem:[#allocation5 + $0x4] sm:$0xf] %vm787, %v798
        %s828 = scalar_lea.vmem %s3, 16
        %v829 = vld [vmem:[%s828] sm:$0xf]
        %v830 = vld [vmem:[%s828 + $0x4] sm:$0xf]
        %v831 = vld [vmem:[#allocation2] sm:$0xf]
        %v832 = vld [vmem:[#allocation2 + $0x4] sm:$0xf]
        %v833 = vld [vmem:[#allocation2 + $0x8] sm:$0xf]
        %v834 = vld [vmem:[#allocation2 + $0xc] sm:$0xf]
        %v835 = vld [vmem:[#allocation2 + $0x10] sm:$0xf]
        %v836 = vld [vmem:[#allocation2 + $0x14] sm:$0xf]
        %s837 = scalar_lea.vmem %s4, 32
        %v838 = vld [vmem:[%s837] sm:$0xff]
        %v839 = vld [vmem:[%s837 + $0x8] sm:$0xff]
        %841 = vset.pattern.permute.xlu0 0
        %842 = vperm.xlu0 %841, %v838
        %v843 = vpop.permute.xlu0 %842
        %846 = vset.pattern.permute.xlu0 0
        %847 = vperm.xlu0 %846, %v839
        %v848 = vpop.permute.xlu0 %847
        %v852 = vunpack.c.l.b16 %v829
        %v853 = vunpack.c.l.b16 %v830
        %v854 = vpack.c.b16 %v853, %v852
        %v861 = vunpack.c.l.b16 %v831
        %v862 = vunpack.c.l.b16 %v832
        %v863 = vunpack.c.l.b16 %v833
        %v864 = vunpack.c.l.b16 %v834
        %v865 = vunpack.c.l.b16 %v835
        %v866 = vunpack.c.l.b16 %v836
        %v867 = vpack.c.b16 %v862, %v861
        %v868 = vpack.c.b16 %v864, %v863
        %v869 = vpack.c.b16 %v866, %v865
        %v874 = vsel %vm554, %v854, 0
        %876 = vmatprep.subr.bf16.mxu0 0
        %877 = vmatpush1.bf16.msra.mxu0 0
        %878 = vmatprep.subr.bf16.mxu0 0
        %879 = vmatpush1.bf16.msra.mxu0 0
        %880 = vmatprep.subr.bf16.mxu0 0
        %881 = vmatpush1.bf16.msra.mxu0 0
        %882 = vmatprep.subr.bf16.mxu0 0
        %883 = vmatpush1.bf16.msra.mxu0 0
        %884 = vmatprep.subr.bf16.mxu0 0
        %885 = vmatpush1.bf16.msra.mxu0 0
        %886 = vmatprep.subr.bf16.mxu0 0
        %887 = vmatpush1.bf16.msra.mxu0 %v869
        %888 = vmatprep.subr.bf16.mxu0 0
        %889 = vmatpush1.bf16.msra.mxu0 %v868
        %890 = vmatprep.subr.bf16.mxu0 0
        %891 = vmatpush1.bf16.msra.mxu0 %v867
        %892 = vmatprep.subr.bf16.mxu0 0
        %893 = vmatpush2.bf16.msra.mxu0 0
        %894 = vmatprep.subr.bf16.mxu0 0
        %895 = vmatpush2.bf16.msra.mxu0 0
        %896 = vmatprep.subr.bf16.mxu0 0
        %897 = vmatpush2.bf16.msra.mxu0 0
        %898 = vmatprep.subr.bf16.mxu0 0
        %899 = vmatpush2.bf16.msra.mxu0 0
        %900 = vmatprep.subr.bf16.mxu0 0
        %901 = vmatpush2.bf16.msra.mxu0 0
        %902 = vmatprep.subr.bf16.mxu0 0
        %903 = vmatpush2.bf16.msra.mxu0 0
        %904 = vmatprep.subr.bf16.mxu0 0
        %905 = vmatpush2.bf16.msra.mxu0 0
        %906 = vmatprep.subr.bf16.mxu0 0
        %907 = vmatpush2.bf16.msra.mxu0 0
        %908 = vmatprep.mubr.bf16.mxu0 0
        %909 = vmatmul.mubr.bf16.gmra.mxu0 %v874
        %v910 = vpop.f32.mrf.mxu0
        %v911 = vadd.f32 %v843, %v910
        %v912 = vpop.f32.mrf.mxu0
        %v913 = vpop.f32.mrf.mxu0
        %v914 = vadd.f32 %v848, %v913
        %v915 = vpop.f32.mrf.mxu0
        %916 = vdwg.mxu0
        %v917 = vmax.f32 %v911, 0.0
        %v918 = vmax.f32 %v914, 0.0
        %919 = vset.pattern.permute.xlu0 1
        %920 = vperm.xlu0 %919, %v838
        %v921 = vpop.permute.xlu0 %920
        %923 = vset.pattern.permute.xlu0 1
        %924 = vperm.xlu0 %923, %v839
        %v925 = vpop.permute.xlu0 %924
        %v927 = vmul.f32 %v917, %v921
        %v928 = vmul.f32 %v918, %v925
        %929 = vset.pattern.permute.xlu0 2
        %930 = vperm.xlu0 %929, %v838
        %v931 = vpop.permute.xlu0 %930
        %933 = vset.pattern.permute.xlu0 2
        %934 = vperm.xlu0 %933, %v839
        %v935 = vpop.permute.xlu0 %934
        %v937 = vadd.f32 %v927, %v931
        %v938 = vadd.f32 %v928, %v935
        %v939 = vadd.f32 %v937, %v782
        %v940 = vadd.f32 %v938, %v783
        %v941 = vmax.f32 %v939, 0.0
        %v942 = vmax.f32 %v940, 0.0
        %v943 = vld [vmem:[%s5] sm:$0x3]
        %v944 = vpack.c.bf16 %v942, %v941
        %v945 = vld [vmem:[%s6] sm:$0xf]
        %947 = vset.pattern.permute.xlu0 0
        %948 = vperm.xlu0 %947, %v945
        %v949 = vpop.permute.xlu0 %948
        %vm951 = vcmask 130048
        %v953 = vsel %vm951, %v943, 0
        %955 = vmatprep.subr.bf16.mxu0 0
        %956 = vmatpush1.bf16.msra.mxu0 0
        %957 = vmatprep.subr.bf16.mxu0 0
        %958 = vmatpush1.bf16.msra.mxu0 0
        %959 = vmatprep.subr.bf16.mxu0 0
        %960 = vmatpush1.bf16.msra.mxu0 0
        %961 = vmatprep.subr.bf16.mxu0 0
        %962 = vmatpush1.bf16.msra.mxu0 0
        %963 = vmatprep.subr.bf16.mxu0 0
        %964 = vmatpush1.bf16.msra.mxu0 0
        %965 = vmatprep.subr.bf16.mxu0 0
        %966 = vmatpush1.bf16.msra.mxu0 0
        %967 = vmatprep.subr.bf16.mxu0 0
        %968 = vmatpush1.bf16.msra.mxu0 0
        %969 = vmatprep.subr.bf16.mxu0 0
        %970 = vmatpush1.bf16.msra.mxu0 %v944
        %971 = vmatprep.subr.bf16.mxu0 0
        %972 = vmatpush2.bf16.msra.mxu0 0
        %973 = vmatprep.subr.bf16.mxu0 0
        %974 = vmatpush2.bf16.msra.mxu0 0
        %975 = vmatprep.subr.bf16.mxu0 0
        %976 = vmatpush2.bf16.msra.mxu0 0
        %977 = vmatprep.subr.bf16.mxu0 0
        %978 = vmatpush2.bf16.msra.mxu0 0
        %979 = vmatprep.subr.bf16.mxu0 0
        %980 = vmatpush2.bf16.msra.mxu0 0
        %981 = vmatprep.subr.bf16.mxu0 0
        %982 = vmatpush2.bf16.msra.mxu0 0
        %983 = vmatprep.subr.bf16.mxu0 0
        %984 = vmatpush2.bf16.msra.mxu0 0
        %985 = vmatprep.subr.bf16.mxu0 0
        %986 = vmatpush2.bf16.msra.mxu0 0
        %987 = vmatprep.mubr.bf16.mxu0 0
        %988 = vmatmul.mubr.bf16.gmra.mxu0 %v953
        %v989 = vpop.f32.mrf.mxu0
        %v990 = vadd.f32 %v949, %v989
        %v991 = vpop.f32.mrf.mxu0
        %v992 = vpop.f32.mrf.mxu0
        %v993 = vpop.f32.mrf.mxu0
        %994 = vdwg.mxu0
        %995 = vst [vmem:[%s296] sm:$0xf] %v990
        %s996 = sand.u32 %s197, 1
        %s997 = scalar_lea.sflag [#allocation7], %s996
        %s998 = sand.u32 %s197, 1
        %s999 = smul.addr %s998, 4
        %s1000 = scalar_lea.vmem [#allocation6], %s999
        // Predicated region
        $region53: #{tpu_custom_call.1} parent=47 // pred_check
          %p1001 = pneg %p207
        $region54: #{tpu_custom_call.1} parent=47 // pred_check_branch
          %1003 = sbr.rel (%p1001) target = $region56
        $region55: #{tpu_custom_call.1} parent=47 // pred_region
          %s1005 = ssub.s32 64, 64
          %1006 = vsyncadd %s997, %s1005
          %s1007 = smul.addr %s25, 2
          %s1008 = sadd.s32 %s26, %s1007
          %s1009 = smul.addr %s1008, 64
          %s1010 = scalar_lea.hbm %s7, %s1009
          %s1012 = sshll.u32 %s1000, 4
          %s1013 = int_to_ptr.vmem [resolvable:$true] %s1012
          %1015 = dma.vmem_to_hbm [thread:$0]  %s1013, 64, %s1010, %s997
        $region56: #{tpu_custom_call.1} parent=47 // pred_fallthru
          _
      $region48: #{tpu_custom_call.1} parent=5 // pred_fallthru
        _
      %p1016 = scmp.le.s32.totalorder 2, %s16
      // Predicated region
      $region57: #{tpu_custom_call.1} parent=5 // pred_check
        %p1017 = pneg %p1016
      $region58: #{tpu_custom_call.1} parent=5 // pred_check_branch
        %1019 = sbr.rel (%p1017) target = $region60
      $region59: #{tpu_custom_call.1} parent=5 // pred_region
        %s1020 = ssub.s32 %s16, 2
        // Predicated region
        $region61: #{tpu_custom_call.1} parent=59 // pred_check
          %p1021 = pneg %p213
        $region62: #{tpu_custom_call.1} parent=59 // pred_check_branch
          %1023 = sbr.rel (%p1021) target = $region64
        $region63: #{tpu_custom_call.1} parent=59 // pred_region
          %s1024 = sand.u32 %s198, 1
          %s1025 = scalar_lea.sflag [#allocation7], %s1024
          %s1026 = sand.u32 %s198, 1
          %s1027 = smul.addr %s1026, 4
          %s1028 = scalar_lea.vmem [#allocation6], %s1027
          %1029 = dma.done %s1025, 64
        $region64: #{tpu_custom_call.1} parent=59 // pred_fallthru
          _
      $region60: #{tpu_custom_call.1} parent=5 // pred_fallthru
        _
    $region6: #{tpu_custom_call.1} parent=1 // loop_footer
      %s20 = sadd.s32 1, %s16
    $region7: #{tpu_custom_call.1} parent=1 // loop_footer_branch
      %15 = sbr.rel target = $region3
    $region8: #{tpu_custom_call.1} parent=1 // loop_exit
      _
    %1030 = vsyncpa [#allocation7], 1
    %s1031 = scalar_lea.sflag [#allocation7], 1
    %1032 = vsyncpa %s1031, 1

</llo_original>
